<compile_context>
chip_gen: v7x
topology: tpu7x:2x2x1
jax: 0.10.0
libtpu: 0.0.40
codegen_flags: <defaults>
</compile_context>

<pallas_src>
import functools

import numpy as np
import jax
import jax.numpy as jnp
from jax import lax
from jax.experimental import pallas as pl
from jax.experimental.pallas import tpu as pltpu

GROWTH = 32
BN_SIZE = 4
BLOCK_CONFIG = (6, 12, 48, 32)        # DenseNet-201
NUM_INIT_FEATURES = 64
NUM_FEATURES_FINAL = 1920
NUM_CLASSES = 6
BN_EPS = 1e-5


# ----------------------------- backbone (plain JAX glue, NHWC) -----------------------------

def _conv(x, w, stride, padding):
    return lax.conv_general_dilated(
        x, w, window_strides=(stride, stride), padding=padding,
        dimension_numbers=("NHWC", "HWIO", "NHWC"))


def _bn(x, p):
    gamma, beta, mean, var = p
    inv = lax.rsqrt(var + BN_EPS)
    scale = (gamma * inv)[None, None, None, :]
    shift = (beta - mean * gamma * inv)[None, None, None, :]
    return x * scale + shift


def densenet201_features(x_nhwc, params):
    # stem: conv7x7/s2 -> BN -> ReLU -> maxpool3/s2
    x = _conv(x_nhwc, params["conv0"], 2, [(3, 3), (3, 3)])
    x = _bn(x, params["norm0"])
    x = jnp.maximum(x, 0.0)
    x = lax.reduce_window(x, -jnp.inf, lax.max,
                          (1, 3, 3, 1), (1, 2, 2, 1),
                          [(0, 0), (1, 1), (1, 1), (0, 0)])
    for block in params["blocks"]:
        for layer in block["layers"]:
            y = jnp.maximum(_bn(x, layer["norm1"]), 0.0)
            y = _conv(y, layer["conv1"], 1, [(0, 0), (0, 0)])
            y = jnp.maximum(_bn(y, layer["norm2"]), 0.0)
            y = _conv(y, layer["conv2"], 1, [(1, 1), (1, 1)])
            x = jnp.concatenate([x, y], axis=-1)
        if "trans_conv" in block:
            x = jnp.maximum(_bn(x, block["trans_norm"]), 0.0)
            x = _conv(x, block["trans_conv"], 1, [(0, 0), (0, 0)])
            x = lax.reduce_window(x, 0.0, lax.add,
                                  (1, 2, 2, 1), (1, 2, 2, 1),
                                  [(0, 0), (0, 0), (0, 0), (0, 0)]) * 0.25
    x = _bn(x, params["norm5"])
    return x                                           # (B, H', W', 1920)


# ------------------------------ Pallas head kernel ------------------------------

def _head_kernel(x_ref, w_ref, b_ref, o_ref, acc_ref, *,
                 inv_s, seq_len, s_tile, need_mask):
    # x_ref: (b_tile, s_tile, C) bf16 block; w_ref: (6, C) f32 (lane-dense);
    # b_ref: (1, 6) f32; o_ref: (b_tile, 6) f32;
    # acc_ref: VMEM (b_tile, C) f32 running channel sum.
    si = pl.program_id(1)

    @pl.when(si == 0)
    def _():
        acc_ref[...] = jnp.zeros_like(acc_ref)

    # self.relu + running sum over the spatial (S) axis of this tile (f32 acc).
    xb = jnp.maximum(x_ref[...], 0).astype(jnp.float32)
    if need_mask:
        # Ragged tail block: rows >= seq_len hold undefined data -> zero them
        # BEFORE the reduction so garbage never reaches the average.
        row = si * s_tile + lax.broadcasted_iota(jnp.int32, xb.shape, 1)
        xb = jnp.where(row < seq_len, xb, 0.0)
    acc_ref[...] += jnp.sum(xb, axis=1)

    @pl.when(si == pl.num_programs(1) - 1)
    def _():
        pooled = acc_ref[...] * inv_s                  # AdaptiveAvgPool2d(1) + view
        logits = lax.dot_general(                      # pooled @ w.T with w kept (6, C)
            pooled, w_ref[...],
            dimension_numbers=(((1,), (1,)), ((), ())),
            preferred_element_type=jnp.float32)
        o_ref[...] = logits + b_ref[...]               # self.mlp (no sigmoid)


def _vmem_capacity_bytes():
    try:
        info = pltpu.get_tpu_info()
        cap = getattr(info, "vmem_capacity_bytes", None)
        if cap:
            return int(cap)
    except Exception:
        pass
    return 64 << 20        # conservative fallback (v7x per-TC VMEM)


def _pick_tiles(B, S, itemsize):
    # Output block (b_tile, 6): b_tile must be a multiple of 8 or equal B.
    # (Wrapper guarantees B % 8 == 0 or B < 8.)
    b_tile = 8 if B % 8 == 0 else B
    vmem_cap = _vmem_capacity_bytes()
    # ~45% of VMEM for the double-buffered input stream, capped at 16 MiB/block.
    block_budget = min(16 << 20, max(4 << 20, int(vmem_cap * 0.45) // 2))
    max_rows = max(16, block_budget // (b_tile * NUM_FEATURES_FINAL * itemsize))
    if S <= max_rows:
        s_tile = S                       # full-extent dim: always legal
    else:
        s_tile = (max_rows // 16) * 16   # multiple of 16 for bf16 sublane packing
    return b_tile, s_tile


def head(feats_nsc, w, b):
    """feats_nsc: (B, S, C=1920), C on lanes (bf16 recommended). Returns (B, 6) f32."""
    B0, S, C = feats_nsc.shape
    x = feats_nsc

    # Keep b_tile sane: if B is large and not a multiple of 8, zero-pad the batch
    # (ReLU(0)=0 contributes nothing); the extra output rows are sliced off below.
    B = B0
    if B0 > 8 and B0 % 8 != 0:
        B = -(-B0 // 8) * 8
        x = jnp.pad(x, ((0, B - B0), (0, 0), (0, 0)))

    itemsize = x.dtype.itemsize
    b_tile, s_tile = _pick_tiles(B, S, itemsize)
    grid = (B // b_tile, pl.cdiv(S, s_tile))
    need_mask = (S % s_tile) != 0        # grid over-covers S; mask the ragged tail in-kernel

    block_bytes = b_tile * s_tile * C * itemsize
    fixed_bytes = (2 * 8 * C * 4         # (6,1920) f32 weight, padded to (8,1920), x2 buffers
                   + 4 * 8 * 128 * 4     # bias + output blocks (lane-padded), x2 buffers each
                   + b_tile * C * 4)     # f32 accumulator scratch
    vmem_limit = int(min(_vmem_capacity_bytes(),
                         max(16 << 20, 2 * block_bytes + fixed_bytes + (2 << 20))))

    kernel = functools.partial(_head_kernel, inv_s=1.0 / float(S), seq_len=S,
                               s_tile=s_tile, need_mask=need_mask)
    out = pl.pallas_call(
        kernel,
        out_shape=jax.ShapeDtypeStruct((B, NUM_CLASSES), jnp.float32),
        grid_spec=pltpu.PrefetchScalarGridSpec(
            num_scalar_prefetch=0,
            grid=grid,
            in_specs=[
                pl.BlockSpec((b_tile, s_tile, C), lambda bi, si: (bi, si, 0)),
                pl.BlockSpec((NUM_CLASSES, C), lambda bi, si: (0, 0)),   # lane-dense (6,1920)
                pl.BlockSpec((1, NUM_CLASSES), lambda bi, si: (0, 0)),
            ],
            out_specs=pl.BlockSpec((b_tile, NUM_CLASSES), lambda bi, si: (bi, 0)),
            scratch_shapes=[pltpu.VMEM((b_tile, C), jnp.float32)],
        ),
        compiler_params=pltpu.CompilerParams(
            dimension_semantics=("parallel", "arbitrary"),
            vmem_limit_bytes=vmem_limit,
        ),
    )(x, w, b.reshape(1, NUM_CLASSES))
    return out[:B0] if B != B0 else out


@jax.jit
def forward(x_nchw, params):
    # Accept NCHW (PyTorch layout) at the boundary; backbone runs NHWC.
    x = jnp.transpose(x_nchw, (0, 2, 3, 1))
    feats = densenet201_features(x, params)             # (B, H', W', 1920)
    B, H, W, C = feats.shape
    # Free reshape (C stays on lanes) + bf16 cast (fuses into the norm5 epilogue):
    # the head kernel is HBM-bound, so streaming bf16 ~halves its wall time.
    feats_nsc = feats.reshape(B, H * W, C).astype(jnp.bfloat16)
    return head(feats_nsc, params["mlp_w"], params["mlp_b"])


# ------------------------------ deterministic params ------------------------------

def make_params():
    rng = np.random.default_rng(0)

    def conv_w(out_c, in_c, k):
        fan_in = in_c * k * k
        w = rng.standard_normal((k, k, in_c, out_c)).astype(np.float32) * np.sqrt(2.0 / fan_in)
        return jnp.asarray(w)                          # HWIO

    def bn_p(c):
        return (jnp.ones((c,), jnp.float32), jnp.zeros((c,), jnp.float32),
                jnp.zeros((c,), jnp.float32), jnp.ones((c,), jnp.float32))

    params = {"conv0": conv_w(NUM_INIT_FEATURES, 3, 7), "norm0": bn_p(NUM_INIT_FEATURES)}
    num_features = NUM_INIT_FEATURES
    blocks = []
    for bi, n_layers in enumerate(BLOCK_CONFIG):
        layers = []
        for li in range(n_layers):
            in_c = num_features + li * GROWTH
            layers.append({
                "norm1": bn_p(in_c),
                "conv1": conv_w(BN_SIZE * GROWTH, in_c, 1),
                "norm2": bn_p(BN_SIZE * GROWTH),
                "conv2": conv_w(GROWTH, BN_SIZE * GROWTH, 3),
            })
        num_features += n_layers * GROWTH
        block = {"layers": layers}
        if bi != len(BLOCK_CONFIG) - 1:
            block["trans_norm"] = bn_p(num_features)
            block["trans_conv"] = conv_w(num_features // 2, num_features, 1)
            num_features //= 2
        blocks.append(block)
    params["blocks"] = blocks
    params["norm5"] = bn_p(num_features)
    assert num_features == NUM_FEATURES_FINAL

    bound = 1.0 / np.sqrt(num_features)
    # nn.Linear(1920, 6): weight (6, 1920) — passed UN-transposed (lane-dense) to the kernel.
    params["mlp_w"] = jnp.asarray(
        rng.uniform(-bound, bound, (NUM_CLASSES, num_features)).astype(np.float32))
    params["mlp_b"] = jnp.asarray(
        rng.uniform(-bound, bound, (NUM_CLASSES,)).astype(np.float32))
    return params


if __name__ == "__main__":
    params = make_params()
    # Smallest input the DenseNet-201 stem/transitions reduce cleanly: 32x32 -> 1x1 features.
    x = jax.random.normal(jax.random.PRNGKey(0), (2, 3, 32, 32), dtype=jnp.float32)
    out = forward(x, params)
    out = jax.block_until_ready(out)
    assert out.shape == (2, NUM_CLASSES) and out.dtype == jnp.float32
    assert bool(jnp.all(jnp.isfinite(out)))
    print("KERNEL_OK")
</pallas_src>

<mosaic_0001>
module attributes {stable_mosaic.version = 11 : i64} {
  func.func @_head_kernel(%arg0: i32, %arg1: i32, %arg2: memref<2x1x1920xbf16, #tpu.memory_space<vmem>>, %arg3: memref<6x1920xf32, #tpu.memory_space<vmem>>, %arg4: memref<1x6xf32, #tpu.memory_space<vmem>>, %arg5: memref<2x6xf32, #tpu.memory_space<vmem>>, %arg6: memref<2x1920xf32, #tpu.memory_space<vmem>>) attributes {dimension_semantics = [#tpu.dimension_semantics<parallel>, #tpu.dimension_semantics<arbitrary>], iteration_bounds = array<i64: 1, 1>, scalar_prefetch = 0 : i64, scratch_operands = 1 : i64, tpu.core_type = #tpu.core_type<tc>, window_params = [{transform_indices = @transform_0, window_bounds = array<i64: 2, 1, 1920>}, {pipeline_mode = #tpu.pipeline_mode<synchronous>, transform_indices = @transform_1, window_bounds = array<i64: 6, 1920>}, {pipeline_mode = #tpu.pipeline_mode<synchronous>, transform_indices = @transform_2, window_bounds = array<i64: 1, 6>}, {transform_indices = @transform_3, window_bounds = array<i64: 2, 6>}]} {
    %c0_i32 = arith.constant 0 : i32
    %0 = arith.cmpi eq, %arg1, %c0_i32 : i32
    %1 = arith.extui %0 : i1 to i32
    %c0_i32_0 = arith.constant 0 : i32
    %2 = arith.cmpi ne, %1, %c0_i32_0 : i32
    scf.if %2 {
      %cst_10 = arith.constant 0.000000e+00 : f32
      %14 = vector.broadcast %cst_10 : f32 to vector<2x1920xf32>
      %c0_11 = arith.constant 0 : index
      %c0_12 = arith.constant 0 : index
      %15 = vector.load %arg6[%c0_11, %c0_12] : memref<2x1920xf32, #tpu.memory_space<vmem>>, vector<2x1920xf32>
      tpu.vector_store %arg6[%c0_11, %c0_12], %14 {strides = array<i32>} : memref<2x1920xf32, #tpu.memory_space<vmem>>, vector<2x1920xf32>,
    } else {
    }
    %c0 = arith.constant 0 : index
    %c0_1 = arith.constant 0 : index
    %c0_2 = arith.constant 0 : index
    %3 = vector.load %arg2[%c0, %c0_1, %c0_2] : memref<2x1x1920xbf16, #tpu.memory_space<vmem>>, vector<2x1x1920xbf16>
    %cst = arith.constant 0.000000e+00 : bf16
    %4 = vector.broadcast %cst : bf16 to vector<2x1x1920xbf16>
    %5 = arith.maximumf %3, %4 : vector<2x1x1920xbf16>
    %6 = arith.extf %5 : vector<2x1x1920xbf16> to vector<2x1x1920xf32>
    %c0_3 = arith.constant 0 : index
    %c0_4 = arith.constant 0 : index
    %7 = vector.load %arg6[%c0_3, %c0_4] : memref<2x1920xf32, #tpu.memory_space<vmem>>, vector<2x1920xf32>
    %cst_5 = arith.constant dense<0.000000e+00> : vector<2x1920xf32>
    %8 = vector.multi_reduction <add>, %6, %cst_5 [1] : vector<2x1x1920xf32> to vector<2x1920xf32>
    %9 = arith.addf %7, %8 : vector<2x1920xf32>
    %c0_6 = arith.constant 0 : index
    %c0_7 = arith.constant 0 : index
    %10 = vector.load %arg6[%c0_6, %c0_7] : memref<2x1920xf32, #tpu.memory_space<vmem>>, vector<2x1920xf32>
    tpu.vector_store %arg6[%c0_6, %c0_7], %9 {strides = array<i32>} : memref<2x1920xf32, #tpu.memory_space<vmem>>, vector<2x1920xf32>,
    %c0_i32_8 = arith.constant 0 : i32
    %11 = arith.cmpi eq, %arg1, %c0_i32_8 : i32
    %12 = arith.extui %11 : i1 to i32
    %c0_i32_9 = arith.constant 0 : i32
    %13 = arith.cmpi ne, %12, %c0_i32_9 : i32
    scf.if %13 {
      %c0_10 = arith.constant 0 : index
      %c0_11 = arith.constant 0 : index
      %14 = vector.load %arg6[%c0_10, %c0_11] : memref<2x1920xf32, #tpu.memory_space<vmem>>, vector<2x1920xf32>
      %cst_12 = arith.constant 1.000000e+00 : f32
      %15 = vector.broadcast %cst_12 : f32 to vector<2x1920xf32>
      %16 = arith.mulf %14, %15 : vector<2x1920xf32>
      %c0_13 = arith.constant 0 : index
      %c0_14 = arith.constant 0 : index
      %17 = vector.load %arg3[%c0_13, %c0_14] : memref<6x1920xf32, #tpu.memory_space<vmem>>, vector<6x1920xf32>
      %cst_15 = arith.constant dense<0.000000e+00> : vector<2x6xf32>
      %18 = tpu.matmul %16, %17, %cst_15 {dimension_numbers = #tpu.dot_dimension_numbers<[1], [1], [0], [0], [0, 0, 1, 0], [], []>} : vector<2x1920xf32>, vector<6x1920xf32>, vector<2x6xf32> -> vector<2x6xf32>
      %c0_16 = arith.constant 0 : index
      %c0_17 = arith.constant 0 : index
      %19 = vector.load %arg4[%c0_16, %c0_17] : memref<1x6xf32, #tpu.memory_space<vmem>>, vector<1x6xf32>
      %20 = vector.broadcast %19 : vector<1x6xf32> to vector<2x6xf32>
      %21 = arith.addf %18, %20 : vector<2x6xf32>
      %c0_18 = arith.constant 0 : index
      %c0_19 = arith.constant 0 : index
      %22 = vector.load %arg5[%c0_18, %c0_19] : memref<2x6xf32, #tpu.memory_space<vmem>>, vector<2x6xf32>
      tpu.vector_store %arg5[%c0_18, %c0_19], %21 {strides = array<i32>} : memref<2x6xf32, #tpu.memory_space<vmem>>, vector<2x6xf32>,
    } else {
    }
    return
  }
  func.func @transform_0(%arg0: i32, %arg1: i32) -> (i32, i32, i32) {
    %c0_i32 = arith.constant 0 : i32
    %c0_i32_0 = arith.constant 0 : i32
    return %arg0, %arg1, %c0_i32 : i32, i32, i32
  }
  func.func @transform_1(%arg0: i32, %arg1: i32) -> (i32, i32) {
    %c0_i32 = arith.constant 0 : i32
    %c0_i32_0 = arith.constant 0 : i32
    %c0_i32_1 = arith.constant 0 : i32
    return %c0_i32, %c0_i32_0 : i32, i32
  }
  func.func @transform_2(%arg0: i32, %arg1: i32) -> (i32, i32) {
    %c0_i32 = arith.constant 0 : i32
    %c0_i32_0 = arith.constant 0 : i32
    %c0_i32_1 = arith.constant 0 : i32
    return %c0_i32, %c0_i32_0 : i32, i32
  }
  func.func @transform_3(%arg0: i32, %arg1: i32) -> (i32, i32) {
    %c0_i32 = arith.constant 0 : i32
    %c0_i32_0 = arith.constant 0 : i32
    return %arg0, %c0_i32 : i32, i32
  }
}

</mosaic_0001>

<llo_original>
// kernel: reverse
$region0: #{reverse}
  #allocation0 [shape = 's32[1]{0}', space=sflag, size = 0x4, scoped, tag = 'scoped memory for reverse']
  %s0 = inlined_call_operand.vmem [shape: f32[3,3,128,32], index: 0, kind: input, shape index: {}]
  %s1 = inlined_call_operand.vmem [shape: bf16[3,3,128,32], index: 1, kind: output, shape index: {}]
  %s2 = scalar_lea.vmem %s0, 256
  %v3 = vld [vmem:[%s2] sm:$0xff]
  %v4 = vpack.c.bf16 0.0, %v3
  %5 = vst [vmem:[%s1] sm:$0xf] %v4
  %s6 = scalar_lea.vmem %s0, 160
  %v7 = vld [vmem:[%s6] sm:$0xff]
  %s8 = scalar_lea.vmem %s1, 48
  %v9 = vpack.c.bf16 0.0, %v7
  %10 = vst [vmem:[%s8] sm:$0xf] %v9
  %s11 = scalar_lea.vmem %s0, 64
  %v12 = vld [vmem:[%s11] sm:$0xff]
  %s13 = scalar_lea.vmem %s1, 96
  %v14 = vpack.c.bf16 0.0, %v12
  %15 = vst [vmem:[%s13] sm:$0xf] %v14
  %s16 = scalar_lea.vmem %s0, 224
  %v17 = vld [vmem:[%s16] sm:$0xff]
  %s18 = scalar_lea.vmem %s1, 16
  %v19 = vpack.c.bf16 0.0, %v17
  %20 = vst [vmem:[%s18] sm:$0xf] %v19
  %s21 = scalar_lea.vmem %s0, 128
  %v22 = vld [vmem:[%s21] sm:$0xff]
  %s23 = scalar_lea.vmem %s1, 64
  %v24 = vpack.c.bf16 0.0, %v22
  %25 = vst [vmem:[%s23] sm:$0xf] %v24
  %s26 = scalar_lea.vmem %s0, 32
  %v27 = vld [vmem:[%s26] sm:$0xff]
  %s28 = scalar_lea.vmem %s1, 112
  %v29 = vpack.c.bf16 0.0, %v27
  %30 = vst [vmem:[%s28] sm:$0xf] %v29
  %s31 = scalar_lea.vmem %s0, 192
  %v32 = vld [vmem:[%s31] sm:$0xff]
  %s33 = scalar_lea.vmem %s1, 32
  %v34 = vpack.c.bf16 0.0, %v32
  %35 = vst [vmem:[%s33] sm:$0xf] %v34
  %s36 = scalar_lea.vmem %s0, 96
  %v37 = vld [vmem:[%s36] sm:$0xff]
  %s38 = scalar_lea.vmem %s1, 80
  %v39 = vpack.c.bf16 0.0, %v37
  %40 = vst [vmem:[%s38] sm:$0xf] %v39
  %v41 = vld [vmem:[%s0] sm:$0xff]
  %s42 = scalar_lea.vmem %s1, 128
  %v43 = vpack.c.bf16 0.0, %v41
  %44 = vst [vmem:[%s42] sm:$0xf] %v43
  %s45 = scalar_lea.vmem %s0, 264
  %v46 = vld [vmem:[%s45] sm:$0xff]
  %s47 = scalar_lea.vmem %s1, 4
  %v48 = vpack.c.bf16 0.0, %v46
  %49 = vst [vmem:[%s47] sm:$0xf] %v48
  %s50 = scalar_lea.vmem %s0, 168
  %v51 = vld [vmem:[%s50] sm:$0xff]
  %s52 = scalar_lea.vmem %s1, 52
  %v53 = vpack.c.bf16 0.0, %v51
  %54 = vst [vmem:[%s52] sm:$0xf] %v53
  %s55 = scalar_lea.vmem %s0, 72
  %v56 = vld [vmem:[%s55] sm:$0xff]
  %s57 = scalar_lea.vmem %s1, 100
  %v58 = vpack.c.bf16 0.0, %v56
  %59 = vst [vmem:[%s57] sm:$0xf] %v58
  %s60 = scalar_lea.vmem %s0, 232
  %v61 = vld [vmem:[%s60] sm:$0xff]
  %s62 = scalar_lea.vmem %s1, 20
  %v63 = vpack.c.bf16 0.0, %v61
  %64 = vst [vmem:[%s62] sm:$0xf] %v63
  %s65 = scalar_lea.vmem %s0, 136
  %v66 = vld [vmem:[%s65] sm:$0xff]
  %s67 = scalar_lea.vmem %s1, 68
  %v68 = vpack.c.bf16 0.0, %v66
  %69 = vst [vmem:[%s67] sm:$0xf] %v68
  %s70 = scalar_lea.vmem %s0, 40
  %v71 = vld [vmem:[%s70] sm:$0xff]
  %s72 = scalar_lea.vmem %s1, 116
  %v73 = vpack.c.bf16 0.0, %v71
  %74 = vst [vmem:[%s72] sm:$0xf] %v73
  %s75 = scalar_lea.vmem %s0, 200
  %v76 = vld [vmem:[%s75] sm:$0xff]
  %s77 = scalar_lea.vmem %s1, 36
  %v78 = vpack.c.bf16 0.0, %v76
  %79 = vst [vmem:[%s77] sm:$0xf] %v78
  %s80 = scalar_lea.vmem %s0, 104
  %v81 = vld [vmem:[%s80] sm:$0xff]
  %s82 = scalar_lea.vmem %s1, 84
  %v83 = vpack.c.bf16 0.0, %v81
  %84 = vst [vmem:[%s82] sm:$0xf] %v83
  %s85 = scalar_lea.vmem %s0, 8
  %v86 = vld [vmem:[%s85] sm:$0xff]
  %s87 = scalar_lea.vmem %s1, 132
  %v88 = vpack.c.bf16 0.0, %v86
  %89 = vst [vmem:[%s87] sm:$0xf] %v88
  %s90 = scalar_lea.vmem %s0, 272
  %v91 = vld [vmem:[%s90] sm:$0xff]
  %s92 = scalar_lea.vmem %s1, 8
  %v93 = vpack.c.bf16 0.0, %v91
  %94 = vst [vmem:[%s92] sm:$0xf] %v93
  %s95 = scalar_lea.vmem %s0, 176
  %v96 = vld [vmem:[%s95] sm:$0xff]
  %s97 = scalar_lea.vmem %s1, 56
  %v98 = vpack.c.bf16 0.0, %v96
  %99 = vst [vmem:[%s97] sm:$0xf] %v98
  %s100 = scalar_lea.vmem %s0, 80
  %v101 = vld [vmem:[%s100] sm:$0xff]
  %s102 = scalar_lea.vmem %s1, 104
  %v103 = vpack.c.bf16 0.0, %v101
  %104 = vst [vmem:[%s102] sm:$0xf] %v103
  %s105 = scalar_lea.vmem %s0, 240
  %v106 = vld [vmem:[%s105] sm:$0xff]
  %s107 = scalar_lea.vmem %s1, 24
  %v108 = vpack.c.bf16 0.0, %v106
  %109 = vst [vmem:[%s107] sm:$0xf] %v108
  %s110 = scalar_lea.vmem %s0, 144
  %v111 = vld [vmem:[%s110] sm:$0xff]
  %s112 = scalar_lea.vmem %s1, 72
  %v113 = vpack.c.bf16 0.0, %v111
  %114 = vst [vmem:[%s112] sm:$0xf] %v113
  %s115 = scalar_lea.vmem %s0, 48
  %v116 = vld [vmem:[%s115] sm:$0xff]
  %s117 = scalar_lea.vmem %s1, 120
  %v118 = vpack.c.bf16 0.0, %v116
  %119 = vst [vmem:[%s117] sm:$0xf] %v118
  %s120 = scalar_lea.vmem %s0, 208
  %v121 = vld [vmem:[%s120] sm:$0xff]
  %s122 = scalar_lea.vmem %s1, 40
  %v123 = vpack.c.bf16 0.0, %v121
  %124 = vst [vmem:[%s122] sm:$0xf] %v123
  %s125 = scalar_lea.vmem %s0, 112
  %v126 = vld [vmem:[%s125] sm:$0xff]
  %s127 = scalar_lea.vmem %s1, 88
  %v128 = vpack.c.bf16 0.0, %v126
  %129 = vst [vmem:[%s127] sm:$0xf] %v128
  %s130 = scalar_lea.vmem %s0, 16
  %v131 = vld [vmem:[%s130] sm:$0xff]
  %s132 = scalar_lea.vmem %s1, 136
  %v133 = vpack.c.bf16 0.0, %v131
  %134 = vst [vmem:[%s132] sm:$0xf] %v133
  %s135 = scalar_lea.vmem %s0, 280
  %v136 = vld [vmem:[%s135] sm:$0xff]
  %s137 = scalar_lea.vmem %s1, 12
  %v138 = vpack.c.bf16 0.0, %v136
  %139 = vst [vmem:[%s137] sm:$0xf] %v138
  %s140 = scalar_lea.vmem %s0, 184
  %v141 = vld [vmem:[%s140] sm:$0xff]
  %s142 = scalar_lea.vmem %s1, 60
  %v143 = vpack.c.bf16 0.0, %v141
  %144 = vst [vmem:[%s142] sm:$0xf] %v143
  %s145 = scalar_lea.vmem %s0, 88
  %v146 = vld [vmem:[%s145] sm:$0xff]
  %s147 = scalar_lea.vmem %s1, 108
  %v148 = vpack.c.bf16 0.0, %v146
  %149 = vst [vmem:[%s147] sm:$0xf] %v148
  %s150 = scalar_lea.vmem %s0, 248
  %v151 = vld [vmem:[%s150] sm:$0xff]
  %s152 = scalar_lea.vmem %s1, 28
  %v153 = vpack.c.bf16 0.0, %v151
  %154 = vst [vmem:[%s152] sm:$0xf] %v153
  %s155 = scalar_lea.vmem %s0, 152
  %v156 = vld [vmem:[%s155] sm:$0xff]
  %s157 = scalar_lea.vmem %s1, 76
  %v158 = vpack.c.bf16 0.0, %v156
  %159 = vst [vmem:[%s157] sm:$0xf] %v158
  %s160 = scalar_lea.vmem %s0, 56
  %v161 = vld [vmem:[%s160] sm:$0xff]
  %s162 = scalar_lea.vmem %s1, 124
  %v163 = vpack.c.bf16 0.0, %v161
  %164 = vst [vmem:[%s162] sm:$0xf] %v163
  %s165 = scalar_lea.vmem %s0, 216
  %v166 = vld [vmem:[%s165] sm:$0xff]
  %s167 = scalar_lea.vmem %s1, 44
  %v168 = vpack.c.bf16 0.0, %v166
  %169 = vst [vmem:[%s167] sm:$0xf] %v168
  %s170 = scalar_lea.vmem %s0, 120
  %v171 = vld [vmem:[%s170] sm:$0xff]
  %s172 = scalar_lea.vmem %s1, 92
  %v173 = vpack.c.bf16 0.0, %v171
  %174 = vst [vmem:[%s172] sm:$0xf] %v173
  %s175 = scalar_lea.vmem %s0, 24
  %v176 = vld [vmem:[%s175] sm:$0xff]
  %s177 = scalar_lea.vmem %s1, 140
  %v178 = vpack.c.bf16 0.0, %v176
  %179 = vst [vmem:[%s177] sm:$0xf] %v178

// kernel: forward.1
$region0: #{forward.1}
  #allocation0 [shape = 'u32[]', space=smem, size = 0x4, offset = 0x4, fixed_abs, tag = 'smem constant byte address 0x4 - core index']
  #allocation1 [shape = 'u32[144,128]{1,0:T(1,128)}', space=vmem, size = 0x12000, scoped, tag = 'internal scratch']
  #allocation2 [shape = 'f32[2,1920]{1,0:T(2,128)}', space=vmem, size = 0x3c00, scoped, tag = 'scratch operand']
  %s0 = inlined_call_operand.vmem [shape: bf16[2,1,1920], index: 0, kind: input, shape index: {}]
  %s1 = inlined_call_operand.vmem [shape: f32[6,1920], index: 1, kind: input, shape index: {}]
  %s2 = inlined_call_operand.vmem [shape: f32[1,6], index: 2, kind: input, shape index: {}]
  %s3 = inlined_call_operand.hbm [shape: f32[2,6], index: 3, kind: output, shape index: {}]
  %s4 = sld [smem:[#allocation0]]
  $region30: #{forward.1} parent=0
    _
  %s6 = ssub.s32 1, %s4
  %s7 = scalar_select 0, %s6, %s4
  $region1: #{forward.1} parent=0
    #allocation3 [shape = 'u8[1024]{0}', space=vmem, size = 0x400, scoped, tag = 'output window, operand 0, single buffered']
    #allocation4 [shape = 's32[1]{0}', space=sflag, size = 0x4, scoped, tag = 'scoped memory for forward.1']
    %8 = vsyncpa [#allocation4], 0
    // Predicated region
    $region2: #{forward.1} parent=1 // pred_check
      _
    $region3: #{forward.1} parent=1 // pred_check_branch
      %10 = sbr.rel (0) target = $region5
    $region4: #{forward.1} parent=1 // pred_region
      _
    $region5: #{forward.1} parent=1 // pred_fallthru
      _
    // Predicated region
    $region6: #{forward.1} parent=1 // pred_check
      _
    $region7: #{forward.1} parent=1 // pred_check_branch
      %12 = sbr.rel (0) target = $region9
    $region8: #{forward.1} parent=1 // pred_region
      _
    $region9: #{forward.1} parent=1 // pred_fallthru
      _
    // Predicated region
    $region10: #{forward.1} parent=1 // pred_check
      _
    $region11: #{forward.1} parent=1 // pred_check_branch
      %14 = sbr.rel (0) target = $region13
    $region12: #{forward.1} parent=1 // pred_region
      _
    $region13: #{forward.1} parent=1 // pred_fallthru
      _
    %p16 = scmp.eq.s32.totalorder 0, 0
    // Predicated region
    $region14: #{forward.1} parent=1 // pred_check
      %p17 = pneg %p16
    $region15: #{forward.1} parent=1 // pred_check_branch
      %19 = sbr.rel (%p17) target = $region17
    $region16: #{forward.1} parent=1 // pred_region
      %20 = vst [vmem:[#allocation2] sm:$0xff] 0.0
      %21 = vst [vmem:[#allocation2 + $0x8] sm:$0xff] 0.0
      %22 = vst [vmem:[#allocation2 + $0x10] sm:$0xff] 0.0
      %23 = vst [vmem:[#allocation2 + $0x18] sm:$0x3f] 0.0
    $region17: #{forward.1} parent=1 // pred_fallthru
      _
    %v24 = vld [vmem:[%s0] sm:$0xff]
    %v25 = vld [vmem:[%s0 + $0x8] sm:$0x7f]
    %v26 = vld [vmem:[%s0 + $0xf] sm:$0xff]
    %v27 = vld [vmem:[%s0 + $0x17] sm:$0x7f]
    %v28 = vmax.bf16 %v24, 0
    %v29 = vmax.bf16 %v25, 0
    %v30 = vmax.bf16 %v26, 0
    %v31 = vmax.bf16 %v27, 0
    %v32 = vunpack.c.l.bf16 %v28
    %v33 = vunpack.c.h.bf16 %v28
    %v34 = vunpack.c.l.bf16 %v29
    %v35 = vunpack.c.h.bf16 %v29
    %v36 = vunpack.c.l.bf16 %v30
    %v37 = vunpack.c.h.bf16 %v30
    %v38 = vunpack.c.l.bf16 %v31
    %v39 = vunpack.c.h.bf16 %v31
    %v40 = vld [vmem:[#allocation2] sm:$0xff]
    %v41 = vld [vmem:[#allocation2 + $0x8] sm:$0xff]
    %v42 = vld [vmem:[#allocation2 + $0x10] sm:$0xff]
    %v43 = vld [vmem:[#allocation2 + $0x18] sm:$0x3f]
    %v44 = vadd.f32 %v32, 0.0
    %v45 = vadd.f32 %v33, 0.0
    %v46 = vadd.f32 %v34, 0.0
    %v47 = vadd.f32 %v35, 0.0
    %v48 = vadd.f32 %v36, 0.0
    %v49 = vadd.f32 %v37, 0.0
    %v50 = vadd.f32 %v38, 0.0
    %v51 = vadd.f32 %v39, 0.0
    %vm60 = vcmask 1044484
    %v61 = vsel %vm60, %v44, %v44
    %vm62 = vcmask 1046534
    %v63 = vsel %vm62, %v44, %v61
    %v64 = vrot.slane %v48, 7
    %vm65 = vcmask 1041409
    %v66 = vsel %vm65, %v64, %v63
    %vm67 = vcmask 1043459
    %v68 = vsel %vm67, %v64, %v66
    %vm69 = vcmask 1045509
    %v70 = vsel %vm69, %v64, %v68
    %vm71 = vcmask 1047559
    %v72 = vsel %vm71, %v64, %v70
    %v73 = vsel %vm60, %v45, %v45
    %v74 = vsel %vm62, %v45, %v73
    %v75 = vrot.slane %v49, 7
    %v76 = vsel %vm65, %v75, %v74
    %v77 = vsel %vm67, %v75, %v76
    %v78 = vsel %vm69, %v75, %v77
    %v79 = vsel %vm71, %v75, %v78
    %v80 = vsel %vm60, %v46, %v46
    %v81 = vsel %vm62, %v46, %v80
    %v82 = vrot.slane %v50, 7
    %v83 = vsel %vm65, %v82, %v81
    %v84 = vsel %vm67, %v82, %v83
    %v85 = vsel %vm69, %v82, %v84
    %v86 = vsel %vm71, %v82, %v85
    %v87 = vsel %vm60, %v47, %v47
    %v88 = vsel %vm62, %v47, %v87
    %v89 = vrot.slane %v51, 7
    %v90 = vsel %vm65, %v89, %v88
    %v91 = vsel %vm67, %v89, %v90
    %v92 = vsel %vm69, %v89, %v91
    %v93 = vsel %vm71, %v89, %v92
    %v98 = vadd.f32 %v40, %v72
    %v99 = vadd.f32 %v41, %v79
    %v100 = vadd.f32 %v42, %v86
    %v101 = vadd.f32 %v43, %v93
    %102 = vst [vmem:[#allocation2] sm:$0xff] %v98
    %103 = vst [vmem:[#allocation2 + $0x8] sm:$0xff] %v99
    %104 = vst [vmem:[#allocation2 + $0x10] sm:$0xff] %v100
    %105 = vst [vmem:[#allocation2 + $0x18] sm:$0x3f] %v101
    // Predicated region
    $region18: #{forward.1} parent=1 // pred_check
      %p106 = pneg %p16
    $region19: #{forward.1} parent=1 // pred_check_branch
      %108 = sbr.rel (%p106) target = $region21
    $region20: #{forward.1} parent=1 // pred_region
      %v109 = vld [vmem:[#allocation2] sm:$0xff]
      %v110 = vld [vmem:[#allocation2 + $0x8] sm:$0xff]
      %v111 = vld [vmem:[#allocation2 + $0x10] sm:$0xff]
      %v112 = vld [vmem:[#allocation2 + $0x18] sm:$0x3f]
      %v113 = vld [vmem:[%s1] sm:$0x3f]
      %v114 = vld [vmem:[%s1 + $0x8] sm:$0x3f]
      %v115 = vld [vmem:[%s1 + $0x10] sm:$0x3f]
      %v116 = vld [vmem:[%s1 + $0x18] sm:$0x3f]
      %v117 = vld [vmem:[%s1 + $0x20] sm:$0x3f]
      %v118 = vld [vmem:[%s1 + $0x28] sm:$0x3f]
      %v119 = vld [vmem:[%s1 + $0x30] sm:$0x3f]
      %v120 = vld [vmem:[%s1 + $0x38] sm:$0x3f]
      %v121 = vld [vmem:[%s1 + $0x40] sm:$0x3f]
      %v122 = vld [vmem:[%s1 + $0x48] sm:$0x3f]
      %v123 = vld [vmem:[%s1 + $0x50] sm:$0x3f]
      %v124 = vld [vmem:[%s1 + $0x58] sm:$0x3f]
      %v125 = vld [vmem:[%s1 + $0x60] sm:$0x3f]
      %v126 = vld [vmem:[%s1 + $0x68] sm:$0x3f]
      %v127 = vld [vmem:[%s1 + $0x70] sm:$0x3f]
      %v128 = vld [vmem:[%s2] sm:$0x1]
      %v130 = vlaneseq
      %v131 = vshrl.u32 %v130, 7
      %v132 = vsub.s32 0, %v131
      %v133 = vrot.slane %v128, %v132
      %v139 = vcombine.high %v109, %v109
      %v141 = vunpack.c.l.s4 1983009808
      %v142 = vunpack.c.0.s8 %v141
      %v143 = vlaneseq
      %v144 = vshrl.u32 %v143, 7
      %v145 = vsub.s32 %v142, %v144
      %v146 = vrot.slane %v109, %v145
      %v148 = vunpack.c.l.s4 1983009808
      %v149 = vunpack.c.0.s8 %v148
      %v150 = vlaneseq
      %v151 = vshrl.u32 %v150, 7
      %v152 = vsub.s32 %v149, %v151
      %v153 = vrot.slane %v139, %v152
      %v154 = vcombine.high %v146, %v146
      %v155 = vcombine.high %v153, %v153
      %v156 = vcombine.high %v110, %v110
      %v158 = vunpack.c.l.s4 1983009808
      %v159 = vunpack.c.0.s8 %v158
      %v160 = vlaneseq
      %v161 = vshrl.u32 %v160, 7
      %v162 = vsub.s32 %v159, %v161
      %v163 = vrot.slane %v110, %v162
      %v165 = vunpack.c.l.s4 1983009808
      %v166 = vunpack.c.0.s8 %v165
      %v167 = vlaneseq
      %v168 = vshrl.u32 %v167, 7
      %v169 = vsub.s32 %v166, %v168
      %v170 = vrot.slane %v156, %v169
      %v171 = vcombine.high %v163, %v163
      %v172 = vcombine.high %v170, %v170
      %v173 = vcombine.high %v111, %v111
      %v175 = vunpack.c.l.s4 1983009808
      %v176 = vunpack.c.0.s8 %v175
      %v177 = vlaneseq
      %v178 = vshrl.u32 %v177, 7
      %v179 = vsub.s32 %v176, %v178
      %v180 = vrot.slane %v111, %v179
      %v182 = vunpack.c.l.s4 1983009808
      %v183 = vunpack.c.0.s8 %v182
      %v184 = vlaneseq
      %v185 = vshrl.u32 %v184, 7
      %v186 = vsub.s32 %v183, %v185
      %v187 = vrot.slane %v173, %v186
      %v188 = vcombine.high %v180, %v180
      %v189 = vcombine.high %v187, %v187
      %v190 = vcombine.high %v112, %v112
      %v192 = vunpack.c.l.s4 1983009808
      %v193 = vunpack.c.0.s8 %v192
      %v194 = vlaneseq
      %v195 = vshrl.u32 %v194, 7
      %v196 = vsub.s32 %v193, %v195
      %v197 = vrot.slane %v112, %v196
      %v199 = vunpack.c.l.s4 1983009808
      %v200 = vunpack.c.0.s8 %v199
      %v201 = vlaneseq
      %v202 = vshrl.u32 %v201, 7
      %v203 = vsub.s32 %v200, %v202
      %v204 = vrot.slane %v190, %v203
      %v205 = vcombine.high %v197, %v197
      %221 = vmatprep.subr.mxu0 %v114
      %222 = vmatpush1.xpose.msra.mxu0 %v113
      %223 = vmatprep.subr.mxu0 0.0
      %224 = vmatpush1.xpose.msra.mxu0 0.0
      %225 = vmatprep.subr.mxu0 0.0
      %226 = vmatpush1.xpose.msra.mxu0 0.0
      %227 = vmatprep.subr.mxu0 0.0
      %228 = vmatpush1.xpose.msra.mxu0 0.0
      %229 = vmatprep.subr.mxu0 0.0
      %230 = vmatpush1.xpose.msra.mxu0 0.0
      %231 = vmatprep.subr.mxu0 0.0
      %232 = vmatpush1.xpose.msra.mxu0 0.0
      %233 = vmatprep.subr.mxu0 0.0
      %234 = vmatpush1.xpose.msra.mxu0 0.0
      %235 = vmatprep.subr.mxu0 0.0
      %236 = vmatpush1.xpose.msra.mxu0 0.0
      %237 = vmatprep.subr.mxu0 0.0
      %238 = vmatpush1.xpose.msra.mxu0 0.0
      %239 = vmatprep.subr.mxu0 0.0
      %240 = vmatpush1.xpose.msra.mxu0 0.0
      %241 = vmatprep.subr.mxu0 0.0
      %242 = vmatpush1.xpose.msra.mxu0 0.0
      %243 = vmatprep.subr.mxu0 0.0
      %244 = vmatpush1.xpose.msra.mxu0 0.0
      %245 = vmatprep.subr.mxu0 0.0
      %246 = vmatpush1.xpose.msra.mxu0 0.0
      %247 = vmatprep.subr.mxu0 0.0
      %248 = vmatpush1.xpose.msra.mxu0 0.0
      %249 = vmatprep.subr.mxu0 0.0
      %250 = vmatpush1.xpose.msra.mxu0 0.0
      %251 = vmatprep.subr.mxu0 0.0
      %252 = vmatpush1.xpose.msra.mxu0 0.0
      %253 = vmatprep.subr.mxu0 0.0
      %254 = vmatpush1.xpose.msra.mxu0 0.0
      %255 = vmatprep.subr.mxu0 0.0
      %256 = vmatpush1.xpose.msra.mxu0 0.0
      %257 = vmatprep.subr.mxu0 0.0
      %258 = vmatpush1.xpose.msra.mxu0 0.0
      %259 = vmatprep.subr.mxu0 0.0
      %260 = vmatpush1.xpose.msra.mxu0 0.0
      %261 = vmatprep.subr.mxu0 0.0
      %262 = vmatpush1.xpose.msra.mxu0 0.0
      %263 = vmatprep.subr.mxu0 0.0
      %264 = vmatpush1.xpose.msra.mxu0 0.0
      %265 = vmatprep.subr.mxu0 0.0
      %266 = vmatpush1.xpose.msra.mxu0 0.0
      %267 = vmatprep.subr.mxu0 0.0
      %268 = vmatpush1.xpose.msra.mxu0 0.0
      %269 = vmatprep.subr.mxu0 0.0
      %270 = vmatpush1.xpose.msra.mxu0 0.0
      %271 = vmatprep.subr.mxu0 0.0
      %272 = vmatpush1.xpose.msra.mxu0 0.0
      %273 = vmatprep.subr.mxu0 0.0
      %274 = vmatpush1.xpose.msra.mxu0 0.0
      %275 = vmatprep.subr.mxu0 0.0
      %276 = vmatpush1.xpose.msra.mxu0 0.0
      %277 = vmatprep.subr.mxu0 0.0
      %278 = vmatpush1.xpose.msra.mxu0 0.0
      %279 = vmatprep.subr.mxu0 0.0
      %280 = vmatpush1.xpose.msra.mxu0 0.0
      %281 = vmatprep.subr.mxu0 0.0
      %282 = vmatpush1.xpose.msra.mxu0 0.0
      %283 = vmatprep.subr.mxu0 0.0
      %284 = vmatpush1.xpose.msra.mxu0 0.0
      %285 = vmatprep.mubr.f32.mxu0 %v154
      %286 = vmatmul.mubr.f32.gmra.mrb[0].mxu0 %v146
      %v287 = vpop.f32.mrb[0].mxu0
      %v288 = vadd.f32 %v133, %v287
      %v289 = vpop.f32.mrb[0].mxu0
      %290 = vdwg.mxu0
      %291 = vmatprep.subr.mxu0 %v116
      %292 = vmatpush1.xpose.msra.mxu0 %v115
      %293 = vmatprep.subr.mxu0 0.0
      %294 = vmatpush1.xpose.msra.mxu0 0.0
      %295 = vmatprep.subr.mxu0 0.0
      %296 = vmatpush1.xpose.msra.mxu0 0.0
      %297 = vmatprep.subr.mxu0 0.0
      %298 = vmatpush1.xpose.msra.mxu0 0.0
      %299 = vmatprep.subr.mxu0 0.0
      %300 = vmatpush1.xpose.msra.mxu0 0.0
      %301 = vmatprep.subr.mxu0 0.0
      %302 = vmatpush1.xpose.msra.mxu0 0.0
      %303 = vmatprep.subr.mxu0 0.0
      %304 = vmatpush1.xpose.msra.mxu0 0.0
      %305 = vmatprep.subr.mxu0 0.0
      %306 = vmatpush1.xpose.msra.mxu0 0.0
      %307 = vmatprep.subr.mxu0 0.0
      %308 = vmatpush1.xpose.msra.mxu0 0.0
      %309 = vmatprep.subr.mxu0 0.0
      %310 = vmatpush1.xpose.msra.mxu0 0.0
      %311 = vmatprep.subr.mxu0 0.0
      %312 = vmatpush1.xpose.msra.mxu0 0.0
      %313 = vmatprep.subr.mxu0 0.0
      %314 = vmatpush1.xpose.msra.mxu0 0.0
      %315 = vmatprep.subr.mxu0 0.0
      %316 = vmatpush1.xpose.msra.mxu0 0.0
      %317 = vmatprep.subr.mxu0 0.0
      %318 = vmatpush1.xpose.msra.mxu0 0.0
      %319 = vmatprep.subr.mxu0 0.0
      %320 = vmatpush1.xpose.msra.mxu0 0.0
      %321 = vmatprep.subr.mxu0 0.0
      %322 = vmatpush1.xpose.msra.mxu0 0.0
      %323 = vmatprep.subr.mxu0 0.0
      %324 = vmatpush1.xpose.msra.mxu0 0.0
      %325 = vmatprep.subr.mxu0 0.0
      %326 = vmatpush1.xpose.msra.mxu0 0.0
      %327 = vmatprep.subr.mxu0 0.0
      %328 = vmatpush1.xpose.msra.mxu0 0.0
      %329 = vmatprep.subr.mxu0 0.0
      %330 = vmatpush1.xpose.msra.mxu0 0.0
      %331 = vmatprep.subr.mxu0 0.0
      %332 = vmatpush1.xpose.msra.mxu0 0.0
      %333 = vmatprep.subr.mxu0 0.0
      %334 = vmatpush1.xpose.msra.mxu0 0.0
      %335 = vmatprep.subr.mxu0 0.0
      %336 = vmatpush1.xpose.msra.mxu0 0.0
      %337 = vmatprep.subr.mxu0 0.0
      %338 = vmatpush1.xpose.msra.mxu0 0.0
      %339 = vmatprep.subr.mxu0 0.0
      %340 = vmatpush1.xpose.msra.mxu0 0.0
      %341 = vmatprep.subr.mxu0 0.0
      %342 = vmatpush1.xpose.msra.mxu0 0.0
      %343 = vmatprep.subr.mxu0 0.0
      %344 = vmatpush1.xpose.msra.mxu0 0.0
      %345 = vmatprep.subr.mxu0 0.0
      %346 = vmatpush1.xpose.msra.mxu0 0.0
      %347 = vmatprep.subr.mxu0 0.0
      %348 = vmatpush1.xpose.msra.mxu0 0.0
      %349 = vmatprep.subr.mxu0 0.0
      %350 = vmatpush1.xpose.msra.mxu0 0.0
      %351 = vmatprep.subr.mxu0 0.0
      %352 = vmatpush1.xpose.msra.mxu0 0.0
      %353 = vmatprep.subr.mxu0 0.0
      %354 = vmatpush1.xpose.msra.mxu0 0.0
      %355 = vmatprep.mubr.f32.mxu0 %v155
      %356 = vmatmul.mubr.f32.gmra.mrb[0].mxu0 %v153
      %v357 = vpop.f32.mrb[0].mxu0
      %v358 = vadd.f32 %v288, %v357
      %v359 = vpop.f32.mrb[0].mxu0
      %360 = vdwg.mxu0
      %361 = vmatprep.subr.mxu0 %v118
      %362 = vmatpush1.xpose.msra.mxu0 %v117
      %363 = vmatprep.subr.mxu0 0.0
      %364 = vmatpush1.xpose.msra.mxu0 0.0
      %365 = vmatprep.subr.mxu0 0.0
      %366 = vmatpush1.xpose.msra.mxu0 0.0
      %367 = vmatprep.subr.mxu0 0.0
      %368 = vmatpush1.xpose.msra.mxu0 0.0
      %369 = vmatprep.subr.mxu0 0.0
      %370 = vmatpush1.xpose.msra.mxu0 0.0
      %371 = vmatprep.subr.mxu0 0.0
      %372 = vmatpush1.xpose.msra.mxu0 0.0
      %373 = vmatprep.subr.mxu0 0.0
      %374 = vmatpush1.xpose.msra.mxu0 0.0
      %375 = vmatprep.subr.mxu0 0.0
      %376 = vmatpush1.xpose.msra.mxu0 0.0
      %377 = vmatprep.subr.mxu0 0.0
      %378 = vmatpush1.xpose.msra.mxu0 0.0
      %379 = vmatprep.subr.mxu0 0.0
      %380 = vmatpush1.xpose.msra.mxu0 0.0
      %381 = vmatprep.subr.mxu0 0.0
      %382 = vmatpush1.xpose.msra.mxu0 0.0
      %383 = vmatprep.subr.mxu0 0.0
      %384 = vmatpush1.xpose.msra.mxu0 0.0
      %385 = vmatprep.subr.mxu0 0.0
      %386 = vmatpush1.xpose.msra.mxu0 0.0
      %387 = vmatprep.subr.mxu0 0.0
      %388 = vmatpush1.xpose.msra.mxu0 0.0
      %389 = vmatprep.subr.mxu0 0.0
      %390 = vmatpush1.xpose.msra.mxu0 0.0
      %391 = vmatprep.subr.mxu0 0.0
      %392 = vmatpush1.xpose.msra.mxu0 0.0
      %393 = vmatprep.subr.mxu0 0.0
      %394 = vmatpush1.xpose.msra.mxu0 0.0
      %395 = vmatprep.subr.mxu0 0.0
      %396 = vmatpush1.xpose.msra.mxu0 0.0
      %397 = vmatprep.subr.mxu0 0.0
      %398 = vmatpush1.xpose.msra.mxu0 0.0
      %399 = vmatprep.subr.mxu0 0.0
      %400 = vmatpush1.xpose.msra.mxu0 0.0
      %401 = vmatprep.subr.mxu0 0.0
      %402 = vmatpush1.xpose.msra.mxu0 0.0
      %403 = vmatprep.subr.mxu0 0.0
      %404 = vmatpush1.xpose.msra.mxu0 0.0
      %405 = vmatprep.subr.mxu0 0.0
      %406 = vmatpush1.xpose.msra.mxu0 0.0
      %407 = vmatprep.subr.mxu0 0.0
      %408 = vmatpush1.xpose.msra.mxu0 0.0
      %409 = vmatprep.subr.mxu0 0.0
      %410 = vmatpush1.xpose.msra.mxu0 0.0
      %411 = vmatprep.subr.mxu0 0.0
      %412 = vmatpush1.xpose.msra.mxu0 0.0
      %413 = vmatprep.subr.mxu0 0.0
      %414 = vmatpush1.xpose.msra.mxu0 0.0
      %415 = vmatprep.subr.mxu0 0.0
      %416 = vmatpush1.xpose.msra.mxu0 0.0
      %417 = vmatprep.subr.mxu0 0.0
      %418 = vmatpush1.xpose.msra.mxu0 0.0
      %419 = vmatprep.subr.mxu0 0.0
      %420 = vmatpush1.xpose.msra.mxu0 0.0
      %421 = vmatprep.subr.mxu0 0.0
      %422 = vmatpush1.xpose.msra.mxu0 0.0
      %423 = vmatprep.subr.mxu0 0.0
      %424 = vmatpush1.xpose.msra.mxu0 0.0
      %425 = vmatprep.mubr.f32.mxu0 %v171
      %426 = vmatmul.mubr.f32.gmra.mrb[0].mxu0 %v163
      %v427 = vpop.f32.mrb[0].mxu0
      %v428 = vadd.f32 %v358, %v427
      %v429 = vpop.f32.mrb[0].mxu0
      %430 = vdwg.mxu0
      %431 = vmatprep.subr.mxu0 %v120
      %432 = vmatpush1.xpose.msra.mxu0 %v119
      %433 = vmatprep.subr.mxu0 0.0
      %434 = vmatpush1.xpose.msra.mxu0 0.0
      %435 = vmatprep.subr.mxu0 0.0
      %436 = vmatpush1.xpose.msra.mxu0 0.0
      %437 = vmatprep.subr.mxu0 0.0
      %438 = vmatpush1.xpose.msra.mxu0 0.0
      %439 = vmatprep.subr.mxu0 0.0
      %440 = vmatpush1.xpose.msra.mxu0 0.0
      %441 = vmatprep.subr.mxu0 0.0
      %442 = vmatpush1.xpose.msra.mxu0 0.0
      %443 = vmatprep.subr.mxu0 0.0
      %444 = vmatpush1.xpose.msra.mxu0 0.0
      %445 = vmatprep.subr.mxu0 0.0
      %446 = vmatpush1.xpose.msra.mxu0 0.0
      %447 = vmatprep.subr.mxu0 0.0
      %448 = vmatpush1.xpose.msra.mxu0 0.0
      %449 = vmatprep.subr.mxu0 0.0
      %450 = vmatpush1.xpose.msra.mxu0 0.0
      %451 = vmatprep.subr.mxu0 0.0
      %452 = vmatpush1.xpose.msra.mxu0 0.0
      %453 = vmatprep.subr.mxu0 0.0
      %454 = vmatpush1.xpose.msra.mxu0 0.0
      %455 = vmatprep.subr.mxu0 0.0
      %456 = vmatpush1.xpose.msra.mxu0 0.0
      %457 = vmatprep.subr.mxu0 0.0
      %458 = vmatpush1.xpose.msra.mxu0 0.0
      %459 = vmatprep.subr.mxu0 0.0
      %460 = vmatpush1.xpose.msra.mxu0 0.0
      %461 = vmatprep.subr.mxu0 0.0
      %462 = vmatpush1.xpose.msra.mxu0 0.0
      %463 = vmatprep.subr.mxu0 0.0
      %464 = vmatpush1.xpose.msra.mxu0 0.0
      %465 = vmatprep.subr.mxu0 0.0
      %466 = vmatpush1.xpose.msra.mxu0 0.0
      %467 = vmatprep.subr.mxu0 0.0
      %468 = vmatpush1.xpose.msra.mxu0 0.0
      %469 = vmatprep.subr.mxu0 0.0
      %470 = vmatpush1.xpose.msra.mxu0 0.0
      %471 = vmatprep.subr.mxu0 0.0
      %472 = vmatpush1.xpose.msra.mxu0 0.0
      %473 = vmatprep.subr.mxu0 0.0
      %474 = vmatpush1.xpose.msra.mxu0 0.0
      %475 = vmatprep.subr.mxu0 0.0
      %476 = vmatpush1.xpose.msra.mxu0 0.0
      %477 = vmatprep.subr.mxu0 0.0
      %478 = vmatpush1.xpose.msra.mxu0 0.0
      %479 = vmatprep.subr.mxu0 0.0
      %480 = vmatpush1.xpose.msra.mxu0 0.0
      %481 = vmatprep.subr.mxu0 0.0
      %482 = vmatpush1.xpose.msra.mxu0 0.0
      %483 = vmatprep.subr.mxu0 0.0
      %484 = vmatpush1.xpose.msra.mxu0 0.0
      %485 = vmatprep.subr.mxu0 0.0
      %486 = vmatpush1.xpose.msra.mxu0 0.0
      %487 = vmatprep.subr.mxu0 0.0
      %488 = vmatpush1.xpose.msra.mxu0 0.0
      %489 = vmatprep.subr.mxu0 0.0
      %490 = vmatpush1.xpose.msra.mxu0 0.0
      %491 = vmatprep.subr.mxu0 0.0
      %492 = vmatpush1.xpose.msra.mxu0 0.0
      %493 = vmatprep.subr.mxu0 0.0
      %494 = vmatpush1.xpose.msra.mxu0 0.0
      %495 = vmatprep.mubr.f32.mxu0 %v172
      %496 = vmatmul.mubr.f32.gmra.mrb[0].mxu0 %v170
      %v497 = vpop.f32.mrb[0].mxu0
      %v498 = vadd.f32 %v428, %v497
      %v499 = vpop.f32.mrb[0].mxu0
      %500 = vdwg.mxu0
      %501 = vmatprep.subr.mxu0 %v122
      %502 = vmatpush1.xpose.msra.mxu0 %v121
      %503 = vmatprep.subr.mxu0 0.0
      %504 = vmatpush1.xpose.msra.mxu0 0.0
      %505 = vmatprep.subr.mxu0 0.0
      %506 = vmatpush1.xpose.msra.mxu0 0.0
      %507 = vmatprep.subr.mxu0 0.0
      %508 = vmatpush1.xpose.msra.mxu0 0.0
      %509 = vmatprep.subr.mxu0 0.0
      %510 = vmatpush1.xpose.msra.mxu0 0.0
      %511 = vmatprep.subr.mxu0 0.0
      %512 = vmatpush1.xpose.msra.mxu0 0.0
      %513 = vmatprep.subr.mxu0 0.0
      %514 = vmatpush1.xpose.msra.mxu0 0.0
      %515 = vmatprep.subr.mxu0 0.0
      %516 = vmatpush1.xpose.msra.mxu0 0.0
      %517 = vmatprep.subr.mxu0 0.0
      %518 = vmatpush1.xpose.msra.mxu0 0.0
      %519 = vmatprep.subr.mxu0 0.0
      %520 = vmatpush1.xpose.msra.mxu0 0.0
      %521 = vmatprep.subr.mxu0 0.0
      %522 = vmatpush1.xpose.msra.mxu0 0.0
      %523 = vmatprep.subr.mxu0 0.0
      %524 = vmatpush1.xpose.msra.mxu0 0.0
      %525 = vmatprep.subr.mxu0 0.0
      %526 = vmatpush1.xpose.msra.mxu0 0.0
      %527 = vmatprep.subr.mxu0 0.0
      %528 = vmatpush1.xpose.msra.mxu0 0.0
      %529 = vmatprep.subr.mxu0 0.0
      %530 = vmatpush1.xpose.msra.mxu0 0.0
      %531 = vmatprep.subr.mxu0 0.0
      %532 = vmatpush1.xpose.msra.mxu0 0.0
      %533 = vmatprep.subr.mxu0 0.0
      %534 = vmatpush1.xpose.msra.mxu0 0.0
      %535 = vmatprep.subr.mxu0 0.0
      %536 = vmatpush1.xpose.msra.mxu0 0.0
      %537 = vmatprep.subr.mxu0 0.0
      %538 = vmatpush1.xpose.msra.mxu0 0.0
      %539 = vmatprep.subr.mxu0 0.0
      %540 = vmatpush1.xpose.msra.mxu0 0.0
      %541 = vmatprep.subr.mxu0 0.0
      %542 = vmatpush1.xpose.msra.mxu0 0.0
      %543 = vmatprep.subr.mxu0 0.0
      %544 = vmatpush1.xpose.msra.mxu0 0.0
      %545 = vmatprep.subr.mxu0 0.0
      %546 = vmatpush1.xpose.msra.mxu0 0.0
      %547 = vmatprep.subr.mxu0 0.0
      %548 = vmatpush1.xpose.msra.mxu0 0.0
      %549 = vmatprep.subr.mxu0 0.0
      %550 = vmatpush1.xpose.msra.mxu0 0.0
      %551 = vmatprep.subr.mxu0 0.0
      %552 = vmatpush1.xpose.msra.mxu0 0.0
      %553 = vmatprep.subr.mxu0 0.0
      %554 = vmatpush1.xpose.msra.mxu0 0.0
      %555 = vmatprep.subr.mxu0 0.0
      %556 = vmatpush1.xpose.msra.mxu0 0.0
      %557 = vmatprep.subr.mxu0 0.0
      %558 = vmatpush1.xpose.msra.mxu0 0.0
      %559 = vmatprep.subr.mxu0 0.0
      %560 = vmatpush1.xpose.msra.mxu0 0.0
      %561 = vmatprep.subr.mxu0 0.0
      %562 = vmatpush1.xpose.msra.mxu0 0.0
      %563 = vmatprep.subr.mxu0 0.0
      %564 = vmatpush1.xpose.msra.mxu0 0.0
      %565 = vmatprep.mubr.f32.mxu0 %v188
      %566 = vmatmul.mubr.f32.gmra.mrb[0].mxu0 %v180
      %v567 = vpop.f32.mrb[0].mxu0
      %v568 = vadd.f32 %v498, %v567
      %v569 = vpop.f32.mrb[0].mxu0
      %570 = vdwg.mxu0
      %571 = vmatprep.subr.mxu0 %v124
      %572 = vmatpush1.xpose.msra.mxu0 %v123
      %573 = vmatprep.subr.mxu0 0.0
      %574 = vmatpush1.xpose.msra.mxu0 0.0
      %575 = vmatprep.subr.mxu0 0.0
      %576 = vmatpush1.xpose.msra.mxu0 0.0
      %577 = vmatprep.subr.mxu0 0.0
      %578 = vmatpush1.xpose.msra.mxu0 0.0
      %579 = vmatprep.subr.mxu0 0.0
      %580 = vmatpush1.xpose.msra.mxu0 0.0
      %581 = vmatprep.subr.mxu0 0.0
      %582 = vmatpush1.xpose.msra.mxu0 0.0
      %583 = vmatprep.subr.mxu0 0.0
      %584 = vmatpush1.xpose.msra.mxu0 0.0
      %585 = vmatprep.subr.mxu0 0.0
      %586 = vmatpush1.xpose.msra.mxu0 0.0
      %587 = vmatprep.subr.mxu0 0.0
      %588 = vmatpush1.xpose.msra.mxu0 0.0
      %589 = vmatprep.subr.mxu0 0.0
      %590 = vmatpush1.xpose.msra.mxu0 0.0
      %591 = vmatprep.subr.mxu0 0.0
      %592 = vmatpush1.xpose.msra.mxu0 0.0
      %593 = vmatprep.subr.mxu0 0.0
      %594 = vmatpush1.xpose.msra.mxu0 0.0
      %595 = vmatprep.subr.mxu0 0.0
      %596 = vmatpush1.xpose.msra.mxu0 0.0
      %597 = vmatprep.subr.mxu0 0.0
      %598 = vmatpush1.xpose.msra.mxu0 0.0
      %599 = vmatprep.subr.mxu0 0.0
      %600 = vmatpush1.xpose.msra.mxu0 0.0
      %601 = vmatprep.subr.mxu0 0.0
      %602 = vmatpush1.xpose.msra.mxu0 0.0
      %603 = vmatprep.subr.mxu0 0.0
      %604 = vmatpush1.xpose.msra.mxu0 0.0
      %605 = vmatprep.subr.mxu0 0.0
      %606 = vmatpush1.xpose.msra.mxu0 0.0
      %607 = vmatprep.subr.mxu0 0.0
      %608 = vmatpush1.xpose.msra.mxu0 0.0
      %609 = vmatprep.subr.mxu0 0.0
      %610 = vmatpush1.xpose.msra.mxu0 0.0
      %611 = vmatprep.subr.mxu0 0.0
      %612 = vmatpush1.xpose.msra.mxu0 0.0
      %613 = vmatprep.subr.mxu0 0.0
      %614 = vmatpush1.xpose.msra.mxu0 0.0
      %615 = vmatprep.subr.mxu0 0.0
      %616 = vmatpush1.xpose.msra.mxu0 0.0
      %617 = vmatprep.subr.mxu0 0.0
      %618 = vmatpush1.xpose.msra.mxu0 0.0
      %619 = vmatprep.subr.mxu0 0.0
      %620 = vmatpush1.xpose.msra.mxu0 0.0
      %621 = vmatprep.subr.mxu0 0.0
      %622 = vmatpush1.xpose.msra.mxu0 0.0
      %623 = vmatprep.subr.mxu0 0.0
      %624 = vmatpush1.xpose.msra.mxu0 0.0
      %625 = vmatprep.subr.mxu0 0.0
      %626 = vmatpush1.xpose.msra.mxu0 0.0
      %627 = vmatprep.subr.mxu0 0.0
      %628 = vmatpush1.xpose.msra.mxu0 0.0
      %629 = vmatprep.subr.mxu0 0.0
      %630 = vmatpush1.xpose.msra.mxu0 0.0
      %631 = vmatprep.subr.mxu0 0.0
      %632 = vmatpush1.xpose.msra.mxu0 0.0
      %633 = vmatprep.subr.mxu0 0.0
      %634 = vmatpush1.xpose.msra.mxu0 0.0
      %635 = vmatprep.mubr.f32.mxu0 %v189
      %636 = vmatmul.mubr.f32.gmra.mrb[0].mxu0 %v187
      %v637 = vpop.f32.mrb[0].mxu0
      %v638 = vadd.f32 %v568, %v637
      %v639 = vpop.f32.mrb[0].mxu0
      %640 = vdwg.mxu0
      %641 = vmatprep.subr.mxu0 %v126
      %642 = vmatpush1.xpose.msra.mxu0 %v125
      %643 = vmatprep.subr.mxu0 0.0
      %644 = vmatpush1.xpose.msra.mxu0 0.0
      %645 = vmatprep.subr.mxu0 0.0
      %646 = vmatpush1.xpose.msra.mxu0 0.0
      %647 = vmatprep.subr.mxu0 0.0
      %648 = vmatpush1.xpose.msra.mxu0 0.0
      %649 = vmatprep.subr.mxu0 0.0
      %650 = vmatpush1.xpose.msra.mxu0 0.0
      %651 = vmatprep.subr.mxu0 0.0
      %652 = vmatpush1.xpose.msra.mxu0 0.0
      %653 = vmatprep.subr.mxu0 0.0
      %654 = vmatpush1.xpose.msra.mxu0 0.0
      %655 = vmatprep.subr.mxu0 0.0
      %656 = vmatpush1.xpose.msra.mxu0 0.0
      %657 = vmatprep.subr.mxu0 0.0
      %658 = vmatpush1.xpose.msra.mxu0 0.0
      %659 = vmatprep.subr.mxu0 0.0
      %660 = vmatpush1.xpose.msra.mxu0 0.0
      %661 = vmatprep.subr.mxu0 0.0
      %662 = vmatpush1.xpose.msra.mxu0 0.0
      %663 = vmatprep.subr.mxu0 0.0
      %664 = vmatpush1.xpose.msra.mxu0 0.0
      %665 = vmatprep.subr.mxu0 0.0
      %666 = vmatpush1.xpose.msra.mxu0 0.0
      %667 = vmatprep.subr.mxu0 0.0
      %668 = vmatpush1.xpose.msra.mxu0 0.0
      %669 = vmatprep.subr.mxu0 0.0
      %670 = vmatpush1.xpose.msra.mxu0 0.0
      %671 = vmatprep.subr.mxu0 0.0
      %672 = vmatpush1.xpose.msra.mxu0 0.0
      %673 = vmatprep.subr.mxu0 0.0
      %674 = vmatpush1.xpose.msra.mxu0 0.0
      %675 = vmatprep.subr.mxu0 0.0
      %676 = vmatpush1.xpose.msra.mxu0 0.0
      %677 = vmatprep.subr.mxu0 0.0
      %678 = vmatpush1.xpose.msra.mxu0 0.0
      %679 = vmatprep.subr.mxu0 0.0
      %680 = vmatpush1.xpose.msra.mxu0 0.0
      %681 = vmatprep.subr.mxu0 0.0
      %682 = vmatpush1.xpose.msra.mxu0 0.0
      %683 = vmatprep.subr.mxu0 0.0
      %684 = vmatpush1.xpose.msra.mxu0 0.0
      %685 = vmatprep.subr.mxu0 0.0
      %686 = vmatpush1.xpose.msra.mxu0 0.0
      %687 = vmatprep.subr.mxu0 0.0
      %688 = vmatpush1.xpose.msra.mxu0 0.0
      %689 = vmatprep.subr.mxu0 0.0
      %690 = vmatpush1.xpose.msra.mxu0 0.0
      %691 = vmatprep.subr.mxu0 0.0
      %692 = vmatpush1.xpose.msra.mxu0 0.0
      %693 = vmatprep.subr.mxu0 0.0
      %694 = vmatpush1.xpose.msra.mxu0 0.0
      %695 = vmatprep.subr.mxu0 0.0
      %696 = vmatpush1.xpose.msra.mxu0 0.0
      %697 = vmatprep.subr.mxu0 0.0
      %698 = vmatpush1.xpose.msra.mxu0 0.0
      %699 = vmatprep.subr.mxu0 0.0
      %700 = vmatpush1.xpose.msra.mxu0 0.0
      %701 = vmatprep.subr.mxu0 0.0
      %702 = vmatpush1.xpose.msra.mxu0 0.0
      %703 = vmatprep.subr.mxu0 0.0
      %704 = vmatpush1.xpose.msra.mxu0 0.0
      %705 = vmatprep.mubr.f32.mxu0 %v205
      %706 = vmatmul.mubr.f32.gmra.mrb[0].mxu0 %v197
      %v707 = vpop.f32.mrb[0].mxu0
      %v708 = vadd.f32 %v638, %v707
      %v709 = vpop.f32.mrb[0].mxu0
      %710 = vdwg.mxu0
      %711 = vmatprep.subr.mxu0 0.0
      %712 = vmatpush1.xpose.msra.mxu0 %v127
      %713 = vmatprep.subr.mxu0 0.0
      %714 = vmatpush1.xpose.msra.mxu0 0.0
      %715 = vmatprep.subr.mxu0 0.0
      %716 = vmatpush1.xpose.msra.mxu0 0.0
      %717 = vmatprep.subr.mxu0 0.0
      %718 = vmatpush1.xpose.msra.mxu0 0.0
      %719 = vmatprep.subr.mxu0 0.0
      %720 = vmatpush1.xpose.msra.mxu0 0.0
      %721 = vmatprep.subr.mxu0 0.0
      %722 = vmatpush1.xpose.msra.mxu0 0.0
      %723 = vmatprep.subr.mxu0 0.0
      %724 = vmatpush1.xpose.msra.mxu0 0.0
      %725 = vmatprep.subr.mxu0 0.0
      %726 = vmatpush1.xpose.msra.mxu0 0.0
      %727 = vmatprep.subr.mxu0 0.0
      %728 = vmatpush1.xpose.msra.mxu0 0.0
      %729 = vmatprep.subr.mxu0 0.0
      %730 = vmatpush1.xpose.msra.mxu0 0.0
      %731 = vmatprep.subr.mxu0 0.0
      %732 = vmatpush1.xpose.msra.mxu0 0.0
      %733 = vmatprep.subr.mxu0 0.0
      %734 = vmatpush1.xpose.msra.mxu0 0.0
      %735 = vmatprep.subr.mxu0 0.0
      %736 = vmatpush1.xpose.msra.mxu0 0.0
      %737 = vmatprep.subr.mxu0 0.0
      %738 = vmatpush1.xpose.msra.mxu0 0.0
      %739 = vmatprep.subr.mxu0 0.0
      %740 = vmatpush1.xpose.msra.mxu0 0.0
      %741 = vmatprep.subr.mxu0 0.0
      %742 = vmatpush1.xpose.msra.mxu0 0.0
      %743 = vmatprep.subr.mxu0 0.0
      %744 = vmatpush1.xpose.msra.mxu0 0.0
      %745 = vmatprep.subr.mxu0 0.0
      %746 = vmatpush1.xpose.msra.mxu0 0.0
      %747 = vmatprep.subr.mxu0 0.0
      %748 = vmatpush1.xpose.msra.mxu0 0.0
      %749 = vmatprep.subr.mxu0 0.0
      %750 = vmatpush1.xpose.msra.mxu0 0.0
      %751 = vmatprep.subr.mxu0 0.0
      %752 = vmatpush1.xpose.msra.mxu0 0.0
      %753 = vmatprep.subr.mxu0 0.0
      %754 = vmatpush1.xpose.msra.mxu0 0.0
      %755 = vmatprep.subr.mxu0 0.0
      %756 = vmatpush1.xpose.msra.mxu0 0.0
      %757 = vmatprep.subr.mxu0 0.0
      %758 = vmatpush1.xpose.msra.mxu0 0.0
      %759 = vmatprep.subr.mxu0 0.0
      %760 = vmatpush1.xpose.msra.mxu0 0.0
      %761 = vmatprep.subr.mxu0 0.0
      %762 = vmatpush1.xpose.msra.mxu0 0.0
      %763 = vmatprep.subr.mxu0 0.0
      %764 = vmatpush1.xpose.msra.mxu0 0.0
      %765 = vmatprep.subr.mxu0 0.0
      %766 = vmatpush1.xpose.msra.mxu0 0.0
      %767 = vmatprep.subr.mxu0 0.0
      %768 = vmatpush1.xpose.msra.mxu0 0.0
      %769 = vmatprep.subr.mxu0 0.0
      %770 = vmatpush1.xpose.msra.mxu0 0.0
      %771 = vmatprep.subr.mxu0 0.0
      %772 = vmatpush1.xpose.msra.mxu0 0.0
      %773 = vmatprep.subr.mxu0 0.0
      %774 = vmatpush1.xpose.msra.mxu0 0.0
      %775 = vmatprep.mubr.f32.mxu0 0.0
      %776 = vmatmul.mubr.f32.gmra.mrb[0].mxu0 %v204
      %v777 = vpop.f32.mrb[0].mxu0
      %v778 = vadd.f32 %v708, %v777
      %v779 = vpop.f32.mrb[0].mxu0
      %780 = vdwg.mxu0
      %vm781 = vcmask 41984
      %782 = vst.msk [vmem:[#allocation3] sm:$0x3] %vm781, %v778
    $region21: #{forward.1} parent=1 // pred_fallthru
      _
    // Predicated region
    $region22: #{forward.1} parent=1 // pred_check
      _
    $region23: #{forward.1} parent=1 // pred_check_branch
      %784 = sbr.rel (0) target = $region25
    $region24: #{forward.1} parent=1 // pred_region
      %s786 = ssub.s32 32, 32
      %787 = vsyncadd [#allocation4], %s786
      %s789 = sshll.u32 [#allocation3], 4
      %s790 = int_to_ptr.vmem [resolvable:$true] %s789
      %792 = dma.vmem_to_hbm [thread:$0]  %s790, 32, %s3, [#allocation4]
    $region25: #{forward.1} parent=1 // pred_fallthru
      _
    // Predicated region
    $region26: #{forward.1} parent=1 // pred_check
      _
    $region27: #{forward.1} parent=1 // pred_check_branch
      %794 = sbr.rel (0) target = $region29
    $region28: #{forward.1} parent=1 // pred_region
      %795 = dma.done [#allocation4], 32
    $region29: #{forward.1} parent=1 // pred_fallthru
      _
    %796 = vsyncpa [#allocation4], 1

</llo_original>
